<compile_context>
chip_gen: v7x
topology: tpu7x:2x2x1
jax: 0.10.0
libtpu: 0.0.40
codegen_flags: <defaults>
</compile_context>

<pallas_src>
import functools

import jax
import jax.numpy as jnp
from jax import lax
from jax.experimental import pallas as pl
from jax.experimental.pallas import tpu as pltpu


def _triple(v):
    return (v, v, v) if isinstance(v, int) else tuple(v)


def _round_up(x, m):
    return ((x + m - 1) // m) * m


# ------------------------------ Pallas kernel --------------------------------
def _conv_bn_kernel(x_ref, w_ref, b_ref, o_ref, slab_ref, *acc,
                    taps, ho, wo_p, ci, n_kd):
    """One (n, do) output plane x one Co tile; accumulated over the Kd axis.

    x_ref   : (sh*sw, Hq, Wq, Ci)   one padded input depth-plane (phase split)
    w_ref   : (Kh*Kw*Ci, tn)        BN-scale-folded weights for depth tap kd
    b_ref   : (1, tn)               folded frozen-BN bias (f32)
    o_ref   : (Ho*Wo_p, tn)         output tile, written on the last kd step
    slab_ref: (Ho*Wo_p, Kh*Kw*Ci)   compute-dtype im2col staging slab (scratch)
    acc     : ((Ho*Wo_p, tn) f32,)  accumulator scratch, present only if Kd > 1
    """
    kd = pl.program_id(3)
    m = ho * wo_p

    # Stage all Kh*Kw taps of this depth plane into one slab, then contract
    # them with a single deep-K MXU matmul.
    for t, (phase, hs, ws) in enumerate(taps):
        xs = x_ref[phase, hs:hs + ho, ws:ws + wo_p, :]          # (Ho, Wo_p, Ci)
        slab_ref[:, t * ci:(t + 1) * ci] = xs.reshape(m, ci)

    part = jnp.dot(slab_ref[...], w_ref[...],
                   preferred_element_type=jnp.float32)          # (M, tn) f32

    if n_kd == 1:
        # Single depth tap: no accumulator round trip at all.
        o_ref[...] = (part + b_ref[...]).astype(o_ref.dtype)
    else:
        acc_ref = acc[0]

        @pl.when(kd == 0)
        def _():
            acc_ref[...] = part                                  # write only

        @pl.when(jnp.logical_and(kd > 0, kd < n_kd - 1))
        def _():
            acc_ref[...] += part

        @pl.when(kd == n_kd - 1)
        def _():                                                 # read only
            o_ref[...] = (acc_ref[...] + part + b_ref[...]).astype(o_ref.dtype)


# -------------------------------- wrapper -------------------------------------
def conv3d_bn_forward(x, conv_w, bn_gamma, bn_beta, bn_rm, bn_rv, *,
                      stride, padding, dilation=1, eps=1e-5,
                      compute_dtype=jnp.bfloat16, out_dtype=None, tn=128):
    """Conv3dBN.forward (FROZEN_BN path).  x: (N,Ci,D,H,W) -> (N,Co,Do,Ho,Wo).

    tn: Co tile / lane width.  128 is native on v5e; use 256 on v6e/v7x to
    fill the 2x256 MXU (re-check the VMEM budget on v7x's 64 MiB).
    """
    if out_dtype is None:
        out_dtype = compute_dtype

    N, Ci, D, H, W = x.shape
    Co, _, Kd, Kh, Kw = conv_w.shape
    sd, sh, sw = _triple(stride)
    pd, phh, pww = _triple(padding)
    dd, dh, dw = _triple(dilation)

    Do = (D + 2 * pd - dd * (Kd - 1) - 1) // sd + 1
    Ho = (H + 2 * phh - dh * (Kh - 1) - 1) // sh + 1
    Wo = (W + 2 * pww - dw * (Kw - 1) - 1) // sw + 1

    # sublane tile of the compute dtype: 8 (f32) / 16 (bf16) / 32 (int8)
    cbytes = jnp.dtype(compute_dtype).itemsize
    obytes = jnp.dtype(out_dtype).itemsize
    sub = max(8, 32 // cbytes)
    Wo_p = _round_up(Wo, sub)          # padded output width -> clean flatten
    Co_p = _round_up(Co, tn)           # lane-dense output channels
    n_co = Co_p // tn
    M = Ho * Wo_p
    K_tap = Kh * Kw * Ci

    # -------- glue: NCDHW -> NDHWC, spatial zero-pad, phase-split H/W --------
    Dp, Hp, Wp = D + 2 * pd, H + 2 * phh, W + 2 * pww
    Hq = max(-(-Hp // sh), (Kh - 1) * dh // sh + Ho)
    Wq = max(-(-Wp // sw), (Kw - 1) * dw // sw + Wo_p)
    xt = jnp.transpose(x, (0, 2, 3, 4, 1)).astype(compute_dtype)  # (N,D,H,W,Ci)
    xp = jnp.pad(xt, ((0, 0), (pd, pd),
                      (phh, Hq * sh - H - phh),
                      (pww, Wq * sw - W - pww), (0, 0)))
    xg = xp.reshape(N, Dp, Hq, sh, Wq, sw, Ci)
    xg = jnp.transpose(xg, (0, 1, 3, 5, 2, 4, 6))                 # phases front
    xg = xg.reshape(N, Dp, sh * sw, Hq, Wq, Ci)

    # -------- weights: fold frozen-BN scale in f32, then cast ------------------
    scale = (bn_gamma.astype(jnp.float32)
             / jnp.sqrt(bn_rv.astype(jnp.float32) + eps))
    bias = bn_beta.astype(jnp.float32) - bn_rm.astype(jnp.float32) * scale
    w_f = conv_w.astype(jnp.float32) * scale[:, None, None, None, None]
    w_r = jnp.transpose(w_f, (2, 3, 4, 1, 0)).reshape(Kd, K_tap, Co)
    w_r = jnp.pad(w_r, ((0, 0), (0, 0), (0, Co_p - Co))).astype(compute_dtype)
    bias = jnp.pad(bias, (0, Co_p - Co)).reshape(1, Co_p)

    # static per-tap (phase, h-start, w-start) slice parameters
    taps = tuple((((kh * dh) % sh) * sw + ((kw * dw) % sw),
                  (kh * dh) // sh, (kw * dw) // sw)
                 for kh in range(Kh) for kw in range(Kw))

    kernel = functools.partial(_conv_bn_kernel, taps=taps,
                               ho=Ho, wo_p=Wo_p, ci=Ci, n_kd=Kd)

    # -------- VMEM budget (double-buffered blocks + scratch + headroom) -------
    x_blk = sh * sw * Hq * Wq * Ci * cbytes
    w_blk = K_tap * tn * cbytes
    o_blk = M * tn * obytes
    slab_bytes = M * K_tap * cbytes
    acc_bytes = M * tn * 4 if Kd > 1 else 0
    need = 2 * (x_blk + w_blk + tn * 4 + o_blk) + slab_bytes + acc_bytes
    vmem_limit = int(min(max(need + (8 << 20), 32 << 20), 100 << 20))

    flops = 2 * N * Do * M * Kd * K_tap * Co_p
    bytes_acc = (N * Do * n_co * Kd * x_blk
                 + N * Do * n_co * Kd * w_blk
                 + N * Do * M * Co_p * obytes)
    cost = pl.CostEstimate(flops=flops, transcendentals=0,
                           bytes_accessed=bytes_acc)

    scratch = [pltpu.VMEM((M, K_tap), compute_dtype)]
    if Kd > 1:
        scratch.append(pltpu.VMEM((M, tn), jnp.float32))

    out = pl.pallas_call(
        kernel,
        out_shape=jax.ShapeDtypeStruct((N, Do, M, Co_p), out_dtype),
        grid_spec=pltpu.PrefetchScalarGridSpec(
            num_scalar_prefetch=0,
            grid=(N, Do, n_co, Kd),
            in_specs=[
                # one padded input depth-plane, selected by do*sd + kd*dd
                pl.BlockSpec((None, None, sh * sw, Hq, Wq, Ci),
                             lambda n, do, jc, kd: (n, do * sd + kd * dd,
                                                    0, 0, 0, 0)),
                # all Kh*Kw taps of depth-tap kd, one Co tile, scale-folded
                pl.BlockSpec((None, K_tap, tn),
                             lambda n, do, jc, kd: (kd, 0, jc)),
                pl.BlockSpec((1, tn), lambda n, do, jc, kd: (0, jc)),
            ],
            out_specs=pl.BlockSpec((None, None, M, tn),
                                   lambda n, do, jc, kd: (n, do, 0, jc)),
            scratch_shapes=scratch,
        ),
        compiler_params=pltpu.CompilerParams(
            dimension_semantics=("parallel", "parallel", "parallel",
                                 "arbitrary"),
            vmem_limit_bytes=vmem_limit,
        ),
        cost_estimate=cost,
    )(xg, w_r, bias)

    # unpad (on the compute/out dtype, before the transpose), back to NCDHW
    out = out.reshape(N, Do, Ho, Wo_p, Co_p)[:, :, :, :Wo, :Co]
    return jnp.transpose(out, (0, 4, 1, 2, 3))


# -------------------------------- reference -----------------------------------
def _reference(x, conv_w, bn_gamma, bn_beta, bn_rm, bn_rv,
               *, stride, padding, dilation=1, eps=1e-5):
    s = _triple(stride)
    p = [(pp, pp) for pp in _triple(padding)]
    d = _triple(dilation)
    out = lax.conv_general_dilated(
        x, conv_w, window_strides=s, padding=p, rhs_dilation=d,
        dimension_numbers=("NCDHW", "OIDHW", "NCDHW"))
    scale = bn_gamma / jnp.sqrt(bn_rv + eps)
    bias = bn_beta - bn_rm * scale
    vs = (1, -1, 1, 1, 1)
    return out * scale.reshape(vs) + bias.reshape(vs)


# ----------------------------------- main --------------------------------------
if __name__ == "__main__":
    key = jax.random.PRNGKey(0)
    k_x, k_w, k_w1, k_g, k_b, k_m, k_v = jax.random.split(key, 7)

    # Small shapes consistent with Conv3dBN(dim_in=4, dim_out=8, kernels=3,
    # stride=1, padding=1)
    N, Ci, D, H, W = 2, 4, 4, 8, 8
    Co, Kd, Kh, Kw = 8, 3, 3, 3

    x = jax.random.normal(k_x, (N, Ci, D, H, W), dtype=jnp.float32)

    # conv weight: kaiming_normal_ (fan_in, relu): std = sqrt(2 / fan_in)
    fan_in = Ci * Kd * Kh * Kw
    conv_w = (jax.random.normal(k_w, (Co, Ci, Kd, Kh, Kw), dtype=jnp.float32)
              * jnp.sqrt(2.0 / fan_in))
    conv_w1 = (jax.random.normal(k_w1, (Co, Ci, 1, 1, 1), dtype=jnp.float32)
               * jnp.sqrt(2.0 / Ci))

    # FrozenBatchNorm3d buffers (non-trivial values, as if loaded from a ckpt)
    bn_gamma = jax.random.uniform(k_g, (Co,), jnp.float32, 0.5, 1.5)
    bn_beta = 0.1 * jax.random.normal(k_b, (Co,), jnp.float32)
    bn_rm = 0.1 * jax.random.normal(k_m, (Co,), jnp.float32)
    bn_rv = jax.random.uniform(k_v, (Co,), jnp.float32, 0.5, 1.5)

    def run(w, stride, padding, dilation, compute_dtype):
        fwd = jax.jit(functools.partial(
            conv3d_bn_forward, stride=stride, padding=padding,
            dilation=dilation, compute_dtype=compute_dtype))
        o = jax.block_until_ready(
            fwd(x, w, bn_gamma, bn_beta, bn_rm, bn_rv))
        r = _reference(x, w, bn_gamma, bn_beta, bn_rm, bn_rv,
                       stride=stride, padding=padding, dilation=dilation)
        return o, r

    # 1) f32 compute path, 3x3x3 kernel, stride 1 / padding 1
    out, ref = run(conv_w, 1, 1, 1, jnp.float32)
    assert out.shape == (N, Co, D, H, W), out.shape
    err = float(jnp.max(jnp.abs(out - ref)))
    assert err < 3e-2, err

    # 2) bf16 compute path (MXU-native dtype, f32 accumulation, bf16 output)
    out_bf, _ = run(conv_w, 1, 1, 1, jnp.bfloat16)
    err_bf = float(jnp.max(jnp.abs(out_bf.astype(jnp.float32) - ref)))
    assert err_bf < 1.5e-1, err_bf

    # 3) f32 compute path, stride 2 (exercises the H/W phase-split path)
    out_s2, ref_s2 = run(conv_w, 2, 1, 1, jnp.float32)
    assert out_s2.shape == ref_s2.shape, (out_s2.shape, ref_s2.shape)
    err_s2 = float(jnp.max(jnp.abs(out_s2 - ref_s2)))
    assert err_s2 < 3e-2, err_s2

    # 4) 1x1x1 kernel (Kd == 1 -> accumulator-free direct-store path)
    out_11, ref_11 = run(conv_w1, 1, 0, 1, jnp.float32)
    assert out_11.shape == ref_11.shape, (out_11.shape, ref_11.shape)
    err_11 = float(jnp.max(jnp.abs(out_11 - ref_11)))
    assert err_11 < 3e-2, err_11

    print("KERNEL_OK")
</pallas_src>

<mosaic_0001>
module attributes {stable_mosaic.version = 11 : i64} {
  func.func @_conv_bn_kernel(%arg0: i32, %arg1: i32, %arg2: i32, %arg3: i32, %arg4: memref<1x1x1x10x10x4xf32, #tpu.memory_space<vmem>>, %arg5: memref<1x36x128xf32, #tpu.memory_space<vmem>>, %arg6: memref<1x128xf32, #tpu.memory_space<vmem>>, %arg7: memref<1x1x64x128xf32, #tpu.memory_space<vmem>>, %arg8: memref<64x36xf32, #tpu.memory_space<vmem>>, %arg9: memref<64x128xf32, #tpu.memory_space<vmem>>) attributes {dimension_semantics = [#tpu.dimension_semantics<parallel>, #tpu.dimension_semantics<parallel>, #tpu.dimension_semantics<parallel>, #tpu.dimension_semantics<arbitrary>], iteration_bounds = array<i64: 2, 4, 1, 3>, scalar_prefetch = 0 : i64, scratch_operands = 2 : i64, tpu.core_type = #tpu.core_type<tc>, window_params = [{transform_indices = @transform_0, window_bounds = array<i64: 1, 1, 1, 10, 10, 4>}, {transform_indices = @transform_1, window_bounds = array<i64: 1, 36, 128>}, {transform_indices = @transform_2, window_bounds = array<i64: 1, 128>}, {transform_indices = @transform_3, window_bounds = array<i64: 1, 1, 64, 128>}]} {
    %c0 = arith.constant 0 : index
    %c0_0 = arith.constant 0 : index
    %c0_1 = arith.constant 0 : index
    %c0_2 = arith.constant 0 : index
    %c0_3 = arith.constant 0 : index
    %c0_4 = arith.constant 0 : index
    %0 = vector.load %arg4[%c0, %c0_0, %c0_1, %c0_2, %c0_3, %c0_4] : memref<1x1x1x10x10x4xf32, #tpu.memory_space<vmem>>, vector<1x1x1x8x8x4xf32>
    %1 = vector.shape_cast %0 : vector<1x1x1x8x8x4xf32> to vector<8x8x4xf32>
    %2 = vector.shape_cast %1 : vector<8x8x4xf32> to vector<64x4xf32>
    %c0_5 = arith.constant 0 : index
    %c0_6 = arith.constant 0 : index
    %3 = vector.load %arg8[%c0_5, %c0_6] : memref<64x36xf32, #tpu.memory_space<vmem>>, vector<64x4xf32>
    tpu.vector_store %arg8[%c0_5, %c0_6], %2 {strides = array<i32>} : memref<64x36xf32, #tpu.memory_space<vmem>>, vector<64x4xf32>,
    %c0_7 = arith.constant 0 : index
    %c0_8 = arith.constant 0 : index
    %c0_9 = arith.constant 0 : index
    %c0_10 = arith.constant 0 : index
    %c1 = arith.constant 1 : index
    %c0_11 = arith.constant 0 : index
    %4 = vector.load %arg4[%c0_7, %c0_8, %c0_9, %c0_10, %c1, %c0_11] : memref<1x1x1x10x10x4xf32, #tpu.memory_space<vmem>>, vector<1x1x1x8x8x4xf32>
    %5 = vector.shape_cast %4 : vector<1x1x1x8x8x4xf32> to vector<8x8x4xf32>
    %6 = vector.shape_cast %5 : vector<8x8x4xf32> to vector<64x4xf32>
    %c0_12 = arith.constant 0 : index
    %c4 = arith.constant 4 : index
    %7 = vector.load %arg8[%c0_12, %c4] : memref<64x36xf32, #tpu.memory_space<vmem>>, vector<64x4xf32>
    tpu.vector_store %arg8[%c0_12, %c4], %6 {strides = array<i32>} : memref<64x36xf32, #tpu.memory_space<vmem>>, vector<64x4xf32>,
    %c0_13 = arith.constant 0 : index
    %c0_14 = arith.constant 0 : index
    %c0_15 = arith.constant 0 : index
    %c0_16 = arith.constant 0 : index
    %c2 = arith.constant 2 : index
    %c0_17 = arith.constant 0 : index
    %8 = vector.load %arg4[%c0_13, %c0_14, %c0_15, %c0_16, %c2, %c0_17] : memref<1x1x1x10x10x4xf32, #tpu.memory_space<vmem>>, vector<1x1x1x8x8x4xf32>
    %9 = vector.shape_cast %8 : vector<1x1x1x8x8x4xf32> to vector<8x8x4xf32>
    %10 = vector.shape_cast %9 : vector<8x8x4xf32> to vector<64x4xf32>
    %c0_18 = arith.constant 0 : index
    %c8 = arith.constant 8 : index
    %11 = vector.load %arg8[%c0_18, %c8] : memref<64x36xf32, #tpu.memory_space<vmem>>, vector<64x4xf32>
    tpu.vector_store %arg8[%c0_18, %c8], %10 {strides = array<i32>} : memref<64x36xf32, #tpu.memory_space<vmem>>, vector<64x4xf32>,
    %c0_19 = arith.constant 0 : index
    %c0_20 = arith.constant 0 : index
    %c0_21 = arith.constant 0 : index
    %c1_22 = arith.constant 1 : index
    %c0_23 = arith.constant 0 : index
    %c0_24 = arith.constant 0 : index
    %12 = vector.load %arg4[%c0_19, %c0_20, %c0_21, %c1_22, %c0_23, %c0_24] : memref<1x1x1x10x10x4xf32, #tpu.memory_space<vmem>>, vector<1x1x1x8x8x4xf32>
    %13 = vector.shape_cast %12 : vector<1x1x1x8x8x4xf32> to vector<8x8x4xf32>
    %14 = vector.shape_cast %13 : vector<8x8x4xf32> to vector<64x4xf32>
    %c0_25 = arith.constant 0 : index
    %c12 = arith.constant 12 : index
    %15 = vector.load %arg8[%c0_25, %c12] : memref<64x36xf32, #tpu.memory_space<vmem>>, vector<64x4xf32>
    tpu.vector_store %arg8[%c0_25, %c12], %14 {strides = array<i32>} : memref<64x36xf32, #tpu.memory_space<vmem>>, vector<64x4xf32>,
    %c0_26 = arith.constant 0 : index
    %c0_27 = arith.constant 0 : index
    %c0_28 = arith.constant 0 : index
    %c1_29 = arith.constant 1 : index
    %c1_30 = arith.constant 1 : index
    %c0_31 = arith.constant 0 : index
    %16 = vector.load %arg4[%c0_26, %c0_27, %c0_28, %c1_29, %c1_30, %c0_31] : memref<1x1x1x10x10x4xf32, #tpu.memory_space<vmem>>, vector<1x1x1x8x8x4xf32>
    %17 = vector.shape_cast %16 : vector<1x1x1x8x8x4xf32> to vector<8x8x4xf32>
    %18 = vector.shape_cast %17 : vector<8x8x4xf32> to vector<64x4xf32>
    %c0_32 = arith.constant 0 : index
    %c16 = arith.constant 16 : index
    %19 = vector.load %arg8[%c0_32, %c16] : memref<64x36xf32, #tpu.memory_space<vmem>>, vector<64x4xf32>
    tpu.vector_store %arg8[%c0_32, %c16], %18 {strides = array<i32>} : memref<64x36xf32, #tpu.memory_space<vmem>>, vector<64x4xf32>,
    %c0_33 = arith.constant 0 : index
    %c0_34 = arith.constant 0 : index
    %c0_35 = arith.constant 0 : index
    %c1_36 = arith.constant 1 : index
    %c2_37 = arith.constant 2 : index
    %c0_38 = arith.constant 0 : index
    %20 = vector.load %arg4[%c0_33, %c0_34, %c0_35, %c1_36, %c2_37, %c0_38] : memref<1x1x1x10x10x4xf32, #tpu.memory_space<vmem>>, vector<1x1x1x8x8x4xf32>
    %21 = vector.shape_cast %20 : vector<1x1x1x8x8x4xf32> to vector<8x8x4xf32>
    %22 = vector.shape_cast %21 : vector<8x8x4xf32> to vector<64x4xf32>
    %c0_39 = arith.constant 0 : index
    %c20 = arith.constant 20 : index
    %23 = vector.load %arg8[%c0_39, %c20] : memref<64x36xf32, #tpu.memory_space<vmem>>, vector<64x4xf32>
    tpu.vector_store %arg8[%c0_39, %c20], %22 {strides = array<i32>} : memref<64x36xf32, #tpu.memory_space<vmem>>, vector<64x4xf32>,
    %c0_40 = arith.constant 0 : index
    %c0_41 = arith.constant 0 : index
    %c0_42 = arith.constant 0 : index
    %c2_43 = arith.constant 2 : index
    %c0_44 = arith.constant 0 : index
    %c0_45 = arith.constant 0 : index
    %24 = vector.load %arg4[%c0_40, %c0_41, %c0_42, %c2_43, %c0_44, %c0_45] : memref<1x1x1x10x10x4xf32, #tpu.memory_space<vmem>>, vector<1x1x1x8x8x4xf32>
    %25 = vector.shape_cast %24 : vector<1x1x1x8x8x4xf32> to vector<8x8x4xf32>
    %26 = vector.shape_cast %25 : vector<8x8x4xf32> to vector<64x4xf32>
    %c0_46 = arith.constant 0 : index
    %c24 = arith.constant 24 : index
    %27 = vector.load %arg8[%c0_46, %c24] : memref<64x36xf32, #tpu.memory_space<vmem>>, vector<64x4xf32>
    tpu.vector_store %arg8[%c0_46, %c24], %26 {strides = array<i32>} : memref<64x36xf32, #tpu.memory_space<vmem>>, vector<64x4xf32>,
    %c0_47 = arith.constant 0 : index
    %c0_48 = arith.constant 0 : index
    %c0_49 = arith.constant 0 : index
    %c2_50 = arith.constant 2 : index
    %c1_51 = arith.constant 1 : index
    %c0_52 = arith.constant 0 : index
    %28 = vector.load %arg4[%c0_47, %c0_48, %c0_49, %c2_50, %c1_51, %c0_52] : memref<1x1x1x10x10x4xf32, #tpu.memory_space<vmem>>, vector<1x1x1x8x8x4xf32>
    %29 = vector.shape_cast %28 : vector<1x1x1x8x8x4xf32> to vector<8x8x4xf32>
    %30 = vector.shape_cast %29 : vector<8x8x4xf32> to vector<64x4xf32>
    %c0_53 = arith.constant 0 : index
    %c28 = arith.constant 28 : index
    %31 = vector.load %arg8[%c0_53, %c28] : memref<64x36xf32, #tpu.memory_space<vmem>>, vector<64x4xf32>
    tpu.vector_store %arg8[%c0_53, %c28], %30 {strides = array<i32>} : memref<64x36xf32, #tpu.memory_space<vmem>>, vector<64x4xf32>,
    %c0_54 = arith.constant 0 : index
    %c0_55 = arith.constant 0 : index
    %c0_56 = arith.constant 0 : index
    %c2_57 = arith.constant 2 : index
    %c2_58 = arith.constant 2 : index
    %c0_59 = arith.constant 0 : index
    %32 = vector.load %arg4[%c0_54, %c0_55, %c0_56, %c2_57, %c2_58, %c0_59] : memref<1x1x1x10x10x4xf32, #tpu.memory_space<vmem>>, vector<1x1x1x8x8x4xf32>
    %33 = vector.shape_cast %32 : vector<1x1x1x8x8x4xf32> to vector<8x8x4xf32>
    %34 = vector.shape_cast %33 : vector<8x8x4xf32> to vector<64x4xf32>
    %c0_60 = arith.constant 0 : index
    %c32 = arith.constant 32 : index
    %35 = vector.load %arg8[%c0_60, %c32] : memref<64x36xf32, #tpu.memory_space<vmem>>, vector<64x4xf32>
    tpu.vector_store %arg8[%c0_60, %c32], %34 {strides = array<i32>} : memref<64x36xf32, #tpu.memory_space<vmem>>, vector<64x4xf32>,
    %c0_61 = arith.constant 0 : index
    %c0_62 = arith.constant 0 : index
    %36 = vector.load %arg8[%c0_61, %c0_62] : memref<64x36xf32, #tpu.memory_space<vmem>>, vector<64x36xf32>
    %c0_63 = arith.constant 0 : index
    %c0_64 = arith.constant 0 : index
    %c0_65 = arith.constant 0 : index
    %37 = vector.load %arg5[%c0_63, %c0_64, %c0_65] : memref<1x36x128xf32, #tpu.memory_space<vmem>>, vector<1x36x128xf32>
    %38 = vector.shape_cast %37 : vector<1x36x128xf32> to vector<36x128xf32>
    %cst = arith.constant dense<0.000000e+00> : vector<64x128xf32>
    %39 = tpu.matmul %36, %38, %cst {dimension_numbers = #tpu.dot_dimension_numbers<[1], [0], [0], [1], [0, 0, 1, 1], [], []>} : vector<64x36xf32>, vector<36x128xf32>, vector<64x128xf32> -> vector<64x128xf32>
    %c0_i32 = arith.constant 0 : i32
    %40 = arith.cmpi eq, %arg3, %c0_i32 : i32
    %41 = arith.extui %40 : i1 to i32
    %c0_i32_66 = arith.constant 0 : i32
    %42 = arith.cmpi ne, %41, %c0_i32_66 : i32
    scf.if %42 {
      %c0_71 = arith.constant 0 : index
      %c0_72 = arith.constant 0 : index
      %51 = vector.load %arg9[%c0_71, %c0_72] : memref<64x128xf32, #tpu.memory_space<vmem>>, vector<64x128xf32>
      tpu.vector_store %arg9[%c0_71, %c0_72], %39 {strides = array<i32>} : memref<64x128xf32, #tpu.memory_space<vmem>>, vector<64x128xf32>,
    } else {
    }
    %c0_i32_67 = arith.constant 0 : i32
    %43 = arith.cmpi sgt, %arg3, %c0_i32_67 : i32
    %c2_i32 = arith.constant 2 : i32
    %44 = arith.cmpi slt, %arg3, %c2_i32 : i32
    %45 = arith.andi %43, %44 : i1
    %46 = arith.extui %45 : i1 to i32
    %c0_i32_68 = arith.constant 0 : i32
    %47 = arith.cmpi ne, %46, %c0_i32_68 : i32
    scf.if %47 {
      %c0_71 = arith.constant 0 : index
      %c0_72 = arith.constant 0 : index
      %51 = vector.load %arg9[%c0_71, %c0_72] : memref<64x128xf32, #tpu.memory_space<vmem>>, vector<64x128xf32>
      %52 = arith.addf %51, %39 : vector<64x128xf32>
      %c0_73 = arith.constant 0 : index
      %c0_74 = arith.constant 0 : index
      %53 = vector.load %arg9[%c0_73, %c0_74] : memref<64x128xf32, #tpu.memory_space<vmem>>, vector<64x128xf32>
      tpu.vector_store %arg9[%c0_73, %c0_74], %52 {strides = array<i32>} : memref<64x128xf32, #tpu.memory_space<vmem>>, vector<64x128xf32>,
    } else {
    }
    %c2_i32_69 = arith.constant 2 : i32
    %48 = arith.cmpi eq, %arg3, %c2_i32_69 : i32
    %49 = arith.extui %48 : i1 to i32
    %c0_i32_70 = arith.constant 0 : i32
    %50 = arith.cmpi ne, %49, %c0_i32_70 : i32
    scf.if %50 {
      %c0_71 = arith.constant 0 : index
      %c0_72 = arith.constant 0 : index
      %51 = vector.load %arg9[%c0_71, %c0_72] : memref<64x128xf32, #tpu.memory_space<vmem>>, vector<64x128xf32>
      %52 = arith.addf %51, %39 : vector<64x128xf32>
      %c0_73 = arith.constant 0 : index
      %c0_74 = arith.constant 0 : index
      %53 = vector.load %arg6[%c0_73, %c0_74] : memref<1x128xf32, #tpu.memory_space<vmem>>, vector<1x128xf32>
      %54 = vector.broadcast %53 : vector<1x128xf32> to vector<64x128xf32>
      %55 = arith.addf %52, %54 : vector<64x128xf32>
      %c0_75 = arith.constant 0 : index
      %c0_76 = arith.constant 0 : index
      %c0_77 = arith.constant 0 : index
      %c0_78 = arith.constant 0 : index
      %56 = vector.load %arg7[%c0_75, %c0_76, %c0_77, %c0_78] : memref<1x1x64x128xf32, #tpu.memory_space<vmem>>, vector<1x1x64x128xf32>
      %57 = vector.shape_cast %56 : vector<1x1x64x128xf32> to vector<64x128xf32>
      %58 = vector.shape_cast %55 : vector<64x128xf32> to vector<1x1x64x128xf32>
      tpu.vector_store %arg7[%c0_75, %c0_76, %c0_77, %c0_78], %58 {strides = array<i32>} : memref<1x1x64x128xf32, #tpu.memory_space<vmem>>, vector<1x1x64x128xf32>,
    } else {
    }
    return
  }
  func.func @transform_0(%arg0: i32, %arg1: i32, %arg2: i32, %arg3: i32) -> (i32, i32, i32, i32, i32, i32) {
    %c1_i32 = arith.constant 1 : i32
    %0 = arith.muli %arg1, %c1_i32 : i32
    %c1_i32_0 = arith.constant 1 : i32
    %1 = arith.muli %arg3, %c1_i32_0 : i32
    %2 = arith.addi %0, %1 : i32
    %c0_i32 = arith.constant 0 : i32
    %c0_i32_1 = arith.constant 0 : i32
    %c0_i32_2 = arith.constant 0 : i32
    %c0_i32_3 = arith.constant 0 : i32
    %c0_i32_4 = arith.constant 0 : i32
    return %arg0, %2, %c0_i32, %c0_i32_1, %c0_i32_2, %c0_i32_3 : i32, i32, i32, i32, i32, i32
  }
  func.func @transform_1(%arg0: i32, %arg1: i32, %arg2: i32, %arg3: i32) -> (i32, i32, i32) {
    %c0_i32 = arith.constant 0 : i32
    %c0_i32_0 = arith.constant 0 : i32
    return %arg3, %c0_i32, %arg2 : i32, i32, i32
  }
  func.func @transform_2(%arg0: i32, %arg1: i32, %arg2: i32, %arg3: i32) -> (i32, i32) {
    %c0_i32 = arith.constant 0 : i32
    %c0_i32_0 = arith.constant 0 : i32
    return %c0_i32, %arg2 : i32, i32
  }
  func.func @transform_3(%arg0: i32, %arg1: i32, %arg2: i32, %arg3: i32) -> (i32, i32, i32, i32) {
    %c0_i32 = arith.constant 0 : i32
    %c0_i32_0 = arith.constant 0 : i32
    return %arg0, %arg1, %c0_i32, %arg2 : i32, i32, i32, i32
  }
}

</mosaic_0001>

<llo_original>
// kernel: conv3d_bn_forward.1
$region0: #{conv3d_bn_forward.1}
  #allocation0 [shape = 'u32[]', space=smem, size = 0x4, offset = 0x4, fixed_abs, tag = 'smem constant byte address 0x4 - core index']
  #allocation1 [shape = 'u32[144,128]{1,0:T(1,128)}', space=vmem, size = 0x12000, scoped, tag = 'internal scratch']
  #allocation2 [shape = 'f32[64,36]{1,0:T(8,128)}', space=vmem, size = 0x8000, scoped, tag = 'scratch operand']
  #allocation3 [shape = 'f32[64,128]{1,0:T(8,128)}', space=vmem, size = 0x8000, scoped, tag = 'scratch operand']
  %s0 = inlined_call_operand.vmem [shape: f32[2,6,1,10,10,4], index: 0, kind: input, shape index: {}]
  %s1 = inlined_call_operand.vmem [shape: f32[3,36,128], index: 1, kind: input, shape index: {}]
  %s2 = inlined_call_operand.vmem [shape: f32[1,128], index: 2, kind: input, shape index: {}]
  %s3 = inlined_call_operand.vmem [shape: f32[2,4,64,128], index: 3, kind: output, shape index: {}]
  %s4 = sld [smem:[#allocation0]]
  $region57: #{conv3d_bn_forward.1} parent=0
    _
  %s6 = ssub.s32 1, %s4
  %s7 = scalar_select 0, %s6, %s4
  loop: start=0, step=1, limit=26
  $region2: #{conv3d_bn_forward.1} parent=0 // loop_pre_header
    _
  $region3: #{conv3d_bn_forward.1} parent=0 // loop_header
    %s9 = sphi 0, %s13
    %p10 = scmp.ge.s32.totalorder %s9, 26
    %s16 = sphi 0, %s42
    %s17 = sphi 0, %s38
    %s18 = sphi 0, %s34
    %s19 = sphi 0, %s30
    %s20 = sphi 0, %s16
    %s21 = sphi 0, %s17
    %s22 = sphi 0, %s18
    %s23 = sphi 0, %s19
    %s24 = sphi 0, %s20
    %s25 = sphi 0, %s21
    %s26 = sphi 0, %s22
    %s27 = sphi 0, %s23
    %s49 = sphi 0, %s51
    %s52 = sphi 0, %s49
    %s53 = sphi 0, %s52
    %s69 = sphi 0, %s53
    %s77 = sphi 0, %s79
    %s80 = sphi 0, %s77
    %s81 = sphi 0, %s80
    %s97 = sphi 0, %s81
    %s103 = sphi 0, %s105
    %s106 = sphi 0, %s103
    %s107 = sphi 0, %s106
    %s123 = sphi 0, %s107
    %s133 = sphi 0, %s135
    %s136 = sphi 0, %s133
    %s137 = sphi 0, %s136
    %s153 = sphi 0, %s137
  $region4: #{conv3d_bn_forward.1} parent=0 // loop_header_branch
    %12 = sbr.rel (%p10) target = $region8
  $region5: #{conv3d_bn_forward.1} parent=0 // loop_body
    %s14 = ssub.s32 %s9, 1
    %s15 = ssub.s32 %s9, 2
    %s28 = sadd.s32 1, %s19
    %p29 = scmp.ge.s32.totalorder %s28, 3
    %s30 = scalar_select %p29, 0, %s28
    %s31 = sadd.s32 1, %s18
    %s32 = scalar_select %p29, %s31, %s18
    %p33 = scmp.ge.s32.totalorder %s32, 1
    %s34 = scalar_select %p33, 0, %s32
    %s35 = sadd.s32 1, %s17
    %s36 = scalar_select %p33, %s35, %s17
    %p37 = scmp.ge.s32.totalorder %s36, 4
    %s38 = scalar_select %p37, 0, %s36
    %s39 = sadd.s32 1, %s16
    %s40 = scalar_select %p37, %s39, %s16
    %p41 = scmp.ge.s32.totalorder %s40, 2
    %s42 = scalar_select %p41, 0, %s40
    %s43 = sadd.s32 %s17, %s19
    %s44 = sadd.s32 %s38, %s30
    %s45 = ssub.s32 %s16, %s42
    %s46 = ssub.s32 %s43, %s44
    %s47 = sor.u32 %s45, %s46
    %p48 = scmp.eq.s32.totalorder %s47, 0
    %s50 = sadd.s32 %s49, 1
    %s51 = scalar_select %p48, %s49, %s50
    %p54 = pneg %p48
    %p55 = scmp.eq.s32.totalorder %s9, 23
    %p56 = por %p54, %p55
    %p57 = scmp.ne.s32.totalorder %s49, %s52
    %p58 = scmp.eq.s32.totalorder %s9, 0
    %p59 = por %p57, %p58
    %p60 = scmp.ne.s32.totalorder %s49, %s52
    %p61 = scmp.eq.s32.totalorder %s14, 23
    %p62 = por %p60, %p61
    %p63 = scmp.ne.s32.totalorder %s52, %s53
    %p64 = scmp.eq.s32.totalorder %s14, 0
    %p65 = por %p63, %p64
    %p66 = scmp.ne.s32.totalorder %s52, %s53
    %p67 = scmp.eq.s32.totalorder %s15, 23
    %p68 = por %p66, %p67
    %p70 = scmp.ne.s32.totalorder %s53, %s69
    %p71 = scmp.eq.s32.totalorder %s15, 0
    %p72 = por %p70, %p71
    %s73 = ssub.s32 %s19, %s30
    %s74 = ssub.s32 %s18, %s34
    %s75 = sor.u32 %s73, %s74
    %p76 = scmp.eq.s32.totalorder %s75, 0
    %s78 = sadd.s32 %s77, 1
    %s79 = scalar_select %p76, %s77, %s78
    %p82 = pneg %p76
    %p83 = scmp.eq.s32.totalorder %s9, 23
    %p84 = por %p82, %p83
    %p85 = scmp.ne.s32.totalorder %s77, %s80
    %p86 = scmp.eq.s32.totalorder %s9, 0
    %p87 = por %p85, %p86
    %p88 = scmp.ne.s32.totalorder %s77, %s80
    %p89 = scmp.eq.s32.totalorder %s14, 23
    %p90 = por %p88, %p89
    %p91 = scmp.ne.s32.totalorder %s80, %s81
    %p92 = scmp.eq.s32.totalorder %s14, 0
    %p93 = por %p91, %p92
    %p94 = scmp.ne.s32.totalorder %s80, %s81
    %p95 = scmp.eq.s32.totalorder %s15, 23
    %p96 = por %p94, %p95
    %p98 = scmp.ne.s32.totalorder %s81, %s97
    %p99 = scmp.eq.s32.totalorder %s15, 0
    %p100 = por %p98, %p99
    %s101 = ssub.s32 %s18, %s34
    %p102 = scmp.eq.s32.totalorder %s101, 0
    %s104 = sadd.s32 %s103, 1
    %s105 = scalar_select %p102, %s103, %s104
    %p108 = pneg %p102
    %p109 = scmp.eq.s32.totalorder %s9, 23
    %p110 = por %p108, %p109
    %p111 = scmp.ne.s32.totalorder %s103, %s106
    %p112 = scmp.eq.s32.totalorder %s9, 0
    %p113 = por %p111, %p112
    %p114 = scmp.ne.s32.totalorder %s103, %s106
    %p115 = scmp.eq.s32.totalorder %s14, 23
    %p116 = por %p114, %p115
    %p117 = scmp.ne.s32.totalorder %s106, %s107
    %p118 = scmp.eq.s32.totalorder %s14, 0
    %p119 = por %p117, %p118
    %p120 = scmp.ne.s32.totalorder %s106, %s107
    %p121 = scmp.eq.s32.totalorder %s15, 23
    %p122 = por %p120, %p121
    %p124 = scmp.ne.s32.totalorder %s107, %s123
    %p125 = scmp.eq.s32.totalorder %s15, 0
    %p126 = por %p124, %p125
    %s127 = ssub.s32 %s16, %s42
    %s128 = ssub.s32 %s17, %s38
    %s129 = sor.u32 %s127, %s128
    %s130 = ssub.s32 %s18, %s34
    %s131 = sor.u32 %s129, %s130
    %p132 = scmp.eq.s32.totalorder %s131, 0
    %s134 = sadd.s32 %s133, 1
    %s135 = scalar_select %p132, %s133, %s134
    %p138 = pneg %p132
    %p139 = scmp.eq.s32.totalorder %s9, 23
    %p140 = por %p138, %p139
    %p141 = scmp.ne.s32.totalorder %s133, %s136
    %p142 = scmp.eq.s32.totalorder %s9, 0
    %p143 = por %p141, %p142
    %p144 = scmp.ne.s32.totalorder %s133, %s136
    %p145 = scmp.eq.s32.totalorder %s14, 23
    %p146 = por %p144, %p145
    %p147 = scmp.ne.s32.totalorder %s136, %s137
    %p148 = scmp.eq.s32.totalorder %s14, 0
    %p149 = por %p147, %p148
    %p150 = scmp.ne.s32.totalorder %s136, %s137
    %p151 = scmp.eq.s32.totalorder %s15, 23
    %p152 = por %p150, %p151
    %p154 = scmp.ne.s32.totalorder %s137, %s153
    %p155 = scmp.eq.s32.totalorder %s15, 0
    %p156 = por %p154, %p155
    %p157 = scmp.le.s32.totalorder 1, %s9
    %p158 = scmp.lt.s32.totalorder %s9, 25
    %p159 = pnand %p157, %p158
    %p160 = pneg %p159
    // Predicated region
    $region9: #{conv3d_bn_forward.1} parent=5 // pred_check
      _
    $region10: #{conv3d_bn_forward.1} parent=5 // pred_check_branch
      %162 = sbr.rel (%p159) target = $region12
    $region11: #{conv3d_bn_forward.1} parent=5 // pred_region
      %s163 = ssub.s32 %s9, 1
      // Predicated region
      $region13: #{conv3d_bn_forward.1} parent=11 // pred_check
        %p164 = pneg %p119
      $region14: #{conv3d_bn_forward.1} parent=11 // pred_check_branch
        %166 = sbr.rel (%p164) target = $region16
      $region15: #{conv3d_bn_forward.1} parent=11 // pred_region
        %p167 = scmp.lt.s32.totalorder %s22, 0
        %s168 = scalar_select %p167, %s22, 0
        %s169 = scalar_lea.vmem %s2, %s168
      $region16: #{conv3d_bn_forward.1} parent=11 // pred_fallthru
        _
    $region12: #{conv3d_bn_forward.1} parent=5 // pred_fallthru
      _
    %p170 = scmp.lt.s32.totalorder %s9, 24
    // Predicated region
    $region17: #{conv3d_bn_forward.1} parent=5 // pred_check
      %p171 = pneg %p170
    $region18: #{conv3d_bn_forward.1} parent=5 // pred_check_branch
      %173 = sbr.rel (%p171) target = $region20
    $region19: #{conv3d_bn_forward.1} parent=5 // pred_region
      // Predicated region
      $region21: #{conv3d_bn_forward.1} parent=19 // pred_check
        %p174 = pneg %p59
      $region22: #{conv3d_bn_forward.1} parent=19 // pred_check_branch
        %176 = sbr.rel (%p174) target = $region24
      $region23: #{conv3d_bn_forward.1} parent=19 // pred_region
        %s177 = sadd.s32 %s17, %s19
        %p178 = scmp.lt.s32.totalorder %s16, 1
        %s179 = scalar_select %p178, %s16, 1
        %p180 = scmp.lt.s32.totalorder %s177, 5
        %s181 = scalar_select %p180, %s177, 5
        %s182 = smul.addr %s181, 20
        %s183 = smul.addr %s179, 120
        %s184 = sadd.s32 %s182, %s183
        %s185 = smul.addr %s184, 8
        %s186 = scalar_lea.vmem %s0, %s185
        %s187 = sadd.s32 %s17, %s19
      $region24: #{conv3d_bn_forward.1} parent=19 // pred_fallthru
        _
      // Predicated region
      $region25: #{conv3d_bn_forward.1} parent=19 // pred_check
        %p188 = pneg %p87
      $region26: #{conv3d_bn_forward.1} parent=19 // pred_check_branch
        %190 = sbr.rel (%p188) target = $region28
      $region27: #{conv3d_bn_forward.1} parent=19 // pred_region
        %p191 = scmp.lt.s32.totalorder %s19, 2
        %s192 = scalar_select %p191, %s19, 2
        %p193 = scmp.lt.s32.totalorder %s18, 0
        %s194 = scalar_select %p193, %s18, 0
        %s195 = smul.addr %s192, 5
        %s196 = sadd.s32 %s194, %s195
        %s197 = smul.addr %s196, 8
        %s198 = scalar_lea.vmem %s1, %s197
      $region28: #{conv3d_bn_forward.1} parent=19 // pred_fallthru
        _
    $region20: #{conv3d_bn_forward.1} parent=5 // pred_fallthru
      _
    %p199 = scmp.le.s32.totalorder 1, %s9
    %p200 = scmp.lt.s32.totalorder %s9, 25
    %p201 = pnand %p199, %p200
    %p202 = pneg %p201
    // Predicated region
    $region29: #{conv3d_bn_forward.1} parent=5 // pred_check
      _
    $region30: #{conv3d_bn_forward.1} parent=5 // pred_check_branch
      %204 = sbr.rel (%p201) target = $region32
    $region31: #{conv3d_bn_forward.1} parent=5 // pred_region
      %s205 = ssub.s32 %s9, 1
      %s206 = sadd.s32 %s21, %s23
      %p207 = scmp.lt.s32.totalorder %s20, 1
      %s208 = scalar_select %p207, %s20, 1
      %p209 = scmp.lt.s32.totalorder %s206, 5
      %s210 = scalar_select %p209, %s206, 5
      %s211 = smul.addr %s210, 20
      %s212 = smul.addr %s208, 120
      %s213 = sadd.s32 %s211, %s212
      %s214 = smul.addr %s213, 8
      %s215 = scalar_lea.vmem %s0, %s214
      %p216 = pneg %p65
      %p217 = pneg %p62
      %p218 = scmp.lt.s32.totalorder %s23, 2
      %s219 = scalar_select %p218, %s23, 2
      %p220 = scmp.lt.s32.totalorder %s22, 0
      %s221 = scalar_select %p220, %s22, 0
      %s222 = smul.addr %s219, 5
      %s223 = sadd.s32 %s221, %s222
      %s224 = smul.addr %s223, 8
      %s225 = scalar_lea.vmem %s1, %s224
      %p226 = pneg %p93
      %p227 = pneg %p90
      %p228 = scmp.lt.s32.totalorder %s22, 0
      %s229 = scalar_select %p228, %s22, 0
      %s230 = scalar_lea.vmem %s2, %s229
      %p231 = pneg %p119
      %p232 = pneg %p116
      %p233 = pneg %p149
      %p234 = pneg %p146
      %p235 = scmp.lt.s32.totalorder %s20, 1
      %s236 = scalar_select %p235, %s20, 1
      %p237 = scmp.lt.s32.totalorder %s21, 3
      %s238 = scalar_select %p237, %s21, 3
      %p239 = scmp.lt.s32.totalorder %s22, 0
      %s240 = scalar_select %p239, %s22, 0
      %s241 = smul.addr %s238, 8
      %s242 = sadd.s32 %s240, %s241
      %s243 = smul.addr %s236, 32
      %s244 = sadd.s32 %s242, %s243
      %s245 = smul.addr %s244, 8
      %s246 = scalar_lea.vmem %s3, %s245
      %s247 = sadd.s32 %s21, %s23
      %p248 = scmp.lt.s32.totalorder %s20, 1
      %s249 = scalar_select %p248, %s20, 1
      %p250 = scmp.lt.s32.totalorder %s247, 5
      %s251 = scalar_select %p250, %s247, 5
      %s252 = smul.addr %s251, 20
      %s253 = smul.addr %s249, 120
      %s254 = sadd.s32 %s252, %s253
      %s255 = smul.addr %s254, 8
      %s256 = scalar_lea.vmem %s0, %s255
      %s257 = sadd.s32 %s21, %s23
      %p258 = scmp.lt.s32.totalorder %s23, 2
      %s259 = scalar_select %p258, %s23, 2
      %p260 = scmp.lt.s32.totalorder %s22, 0
      %s261 = scalar_select %p260, %s22, 0
      %s262 = smul.addr %s259, 5
      %s263 = sadd.s32 %s261, %s262
      %s264 = smul.addr %s263, 8
      %s265 = scalar_lea.vmem %s1, %s264
      %p266 = scmp.lt.s32.totalorder %s22, 0
      %s267 = scalar_select %p266, %s22, 0
      %s268 = scalar_lea.vmem %s2, %s267
      %p269 = scmp.lt.s32.totalorder %s20, 1
      %s270 = scalar_select %p269, %s20, 1
      %p271 = scmp.lt.s32.totalorder %s21, 3
      %s272 = scalar_select %p271, %s21, 3
      %p273 = scmp.lt.s32.totalorder %s22, 0
      %s274 = scalar_select %p273, %s22, 0
      %s275 = smul.addr %s272, 8
      %s276 = sadd.s32 %s274, %s275
      %s277 = smul.addr %s270, 32
      %s278 = sadd.s32 %s276, %s277
      %s279 = smul.addr %s278, 8
      %s280 = scalar_lea.vmem %s3, %s279
      %v281 = vld [vmem:[%s256] sm:$0xff]
      %v282 = vld [vmem:[%s256 + $0x10] sm:$0xff]
      %v283 = vld [vmem:[%s256 + $0x20] sm:$0xff]
      %v284 = vld [vmem:[%s256 + $0x30] sm:$0xff]
      %v285 = vld [vmem:[%s256 + $0x40] sm:$0xff]
      %v286 = vld [vmem:[%s256 + $0x50] sm:$0xff]
      %v287 = vld [vmem:[%s256 + $0x60] sm:$0xff]
      %v288 = vld [vmem:[%s256 + $0x70] sm:$0xff]
      %vm289 = vcmask 31744
      %290 = vst.msk [vmem:[#allocation2] sm:$0xff] %vm289, %v281
      %291 = vst.msk [vmem:[#allocation2 + $0x8] sm:$0xff] %vm289, %v282
      %292 = vst.msk [vmem:[#allocation2 + $0x10] sm:$0xff] %vm289, %v283
      %293 = vst.msk [vmem:[#allocation2 + $0x18] sm:$0xff] %vm289, %v284
      %294 = vst.msk [vmem:[#allocation2 + $0x20] sm:$0xff] %vm289, %v285
      %295 = vst.msk [vmem:[#allocation2 + $0x28] sm:$0xff] %vm289, %v286
      %296 = vst.msk [vmem:[#allocation2 + $0x30] sm:$0xff] %vm289, %v287
      %297 = vst.msk [vmem:[#allocation2 + $0x38] sm:$0xff] %vm289, %v288
      %v298 = vld [vmem:[%s256 + $0x1] sm:$0xff]
      %v299 = vld [vmem:[%s256 + $0x11] sm:$0xff]
      %v300 = vld [vmem:[%s256 + $0x21] sm:$0xff]
      %v301 = vld [vmem:[%s256 + $0x31] sm:$0xff]
      %v302 = vld [vmem:[%s256 + $0x41] sm:$0xff]
      %v303 = vld [vmem:[%s256 + $0x51] sm:$0xff]
      %v304 = vld [vmem:[%s256 + $0x61] sm:$0xff]
      %v305 = vld [vmem:[%s256 + $0x71] sm:$0xff]
      %314 = vrot.lane.b32.xlu0 %v298, 4
      %v315 = vpop.permute.xlu0 %314
      %316 = vrot.lane.b32.xlu0 %v299, 4
      %v317 = vpop.permute.xlu0 %316
      %318 = vrot.lane.b32.xlu0 %v300, 4
      %v319 = vpop.permute.xlu0 %318
      %320 = vrot.lane.b32.xlu0 %v301, 4
      %v321 = vpop.permute.xlu0 %320
      %322 = vrot.lane.b32.xlu0 %v302, 4
      %v323 = vpop.permute.xlu0 %322
      %324 = vrot.lane.b32.xlu0 %v303, 4
      %v325 = vpop.permute.xlu0 %324
      %326 = vrot.lane.b32.xlu0 %v304, 4
      %v327 = vpop.permute.xlu0 %326
      %328 = vrot.lane.b32.xlu0 %v305, 4
      %v329 = vpop.permute.xlu0 %328
      %vm338 = vcmask 64544
      %339 = vst.msk [vmem:[#allocation2] sm:$0xff] %vm338, %v315
      %340 = vst.msk [vmem:[#allocation2 + $0x8] sm:$0xff] %vm338, %v317
      %341 = vst.msk [vmem:[#allocation2 + $0x10] sm:$0xff] %vm338, %v319
      %342 = vst.msk [vmem:[#allocation2 + $0x18] sm:$0xff] %vm338, %v321
      %343 = vst.msk [vmem:[#allocation2 + $0x20] sm:$0xff] %vm338, %v323
      %344 = vst.msk [vmem:[#allocation2 + $0x28] sm:$0xff] %vm338, %v325
      %345 = vst.msk [vmem:[#allocation2 + $0x30] sm:$0xff] %vm338, %v327
      %346 = vst.msk [vmem:[#allocation2 + $0x38] sm:$0xff] %vm338, %v329
      %v347 = vld [vmem:[%s256 + $0x2] sm:$0xff]
      %v348 = vld [vmem:[%s256 + $0x12] sm:$0xff]
      %v349 = vld [vmem:[%s256 + $0x22] sm:$0xff]
      %v350 = vld [vmem:[%s256 + $0x32] sm:$0xff]
      %v351 = vld [vmem:[%s256 + $0x42] sm:$0xff]
      %v352 = vld [vmem:[%s256 + $0x52] sm:$0xff]
      %v353 = vld [vmem:[%s256 + $0x62] sm:$0xff]
      %v354 = vld [vmem:[%s256 + $0x72] sm:$0xff]
      %363 = vrot.lane.b32.xlu0 %v347, 8
      %v364 = vpop.permute.xlu0 %363
      %365 = vrot.lane.b32.xlu0 %v348, 8
      %v366 = vpop.permute.xlu0 %365
      %367 = vrot.lane.b32.xlu0 %v349, 8
      %v368 = vpop.permute.xlu0 %367
      %369 = vrot.lane.b32.xlu0 %v350, 8
      %v370 = vpop.permute.xlu0 %369
      %371 = vrot.lane.b32.xlu0 %v351, 8
      %v372 = vpop.permute.xlu0 %371
      %373 = vrot.lane.b32.xlu0 %v352, 8
      %v374 = vpop.permute.xlu0 %373
      %375 = vrot.lane.b32.xlu0 %v353, 8
      %v376 = vpop.permute.xlu0 %375
      %377 = vrot.lane.b32.xlu0 %v354, 8
      %v378 = vpop.permute.xlu0 %377
      %vm387 = vcmask 97344
      %388 = vst.msk [vmem:[#allocation2] sm:$0xff] %vm387, %v364
      %389 = vst.msk [vmem:[#allocation2 + $0x8] sm:$0xff] %vm387, %v366
      %390 = vst.msk [vmem:[#allocation2 + $0x10] sm:$0xff] %vm387, %v368
      %391 = vst.msk [vmem:[#allocation2 + $0x18] sm:$0xff] %vm387, %v370
      %392 = vst.msk [vmem:[#allocation2 + $0x20] sm:$0xff] %vm387, %v372
      %393 = vst.msk [vmem:[#allocation2 + $0x28] sm:$0xff] %vm387, %v374
      %394 = vst.msk [vmem:[#allocation2 + $0x30] sm:$0xff] %vm387, %v376
      %395 = vst.msk [vmem:[#allocation2 + $0x38] sm:$0xff] %vm387, %v378
      %s396 = scalar_lea.vmem %s256, 16
      %v397 = vld [vmem:[%s396] sm:$0xff]
      %v398 = vld [vmem:[%s396 + $0x10] sm:$0xff]
      %v399 = vld [vmem:[%s396 + $0x20] sm:$0xff]
      %v400 = vld [vmem:[%s396 + $0x30] sm:$0xff]
      %v401 = vld [vmem:[%s396 + $0x40] sm:$0xff]
      %v402 = vld [vmem:[%s396 + $0x50] sm:$0xff]
      %v403 = vld [vmem:[%s396 + $0x60] sm:$0xff]
      %v404 = vld [vmem:[%s396 + $0x70] sm:$0xff]
      %413 = vrot.lane.b32.xlu0 %v397, 12
      %v414 = vpop.permute.xlu0 %413
      %415 = vrot.lane.b32.xlu0 %v398, 12
      %v416 = vpop.permute.xlu0 %415
      %417 = vrot.lane.b32.xlu0 %v399, 12
      %v418 = vpop.permute.xlu0 %417
      %419 = vrot.lane.b32.xlu0 %v400, 12
      %v420 = vpop.permute.xlu0 %419
      %421 = vrot.lane.b32.xlu0 %v401, 12
      %v422 = vpop.permute.xlu0 %421
      %423 = vrot.lane.b32.xlu0 %v402, 12
      %v424 = vpop.permute.xlu0 %423
      %425 = vrot.lane.b32.xlu0 %v403, 12
      %v426 = vpop.permute.xlu0 %425
      %427 = vrot.lane.b32.xlu0 %v404, 12
      %v428 = vpop.permute.xlu0 %427
      %vm437 = vcmask 130144
      %438 = vst.msk [vmem:[#allocation2] sm:$0xff] %vm437, %v414
      %439 = vst.msk [vmem:[#allocation2 + $0x8] sm:$0xff] %vm437, %v416
      %440 = vst.msk [vmem:[#allocation2 + $0x10] sm:$0xff] %vm437, %v418
      %441 = vst.msk [vmem:[#allocation2 + $0x18] sm:$0xff] %vm437, %v420
      %442 = vst.msk [vmem:[#allocation2 + $0x20] sm:$0xff] %vm437, %v422
      %443 = vst.msk [vmem:[#allocation2 + $0x28] sm:$0xff] %vm437, %v424
      %444 = vst.msk [vmem:[#allocation2 + $0x30] sm:$0xff] %vm437, %v426
      %445 = vst.msk [vmem:[#allocation2 + $0x38] sm:$0xff] %vm437, %v428
      %v446 = vld [vmem:[%s396 + $0x1] sm:$0xff]
      %v447 = vld [vmem:[%s396 + $0x11] sm:$0xff]
      %v448 = vld [vmem:[%s396 + $0x21] sm:$0xff]
      %v449 = vld [vmem:[%s396 + $0x31] sm:$0xff]
      %v450 = vld [vmem:[%s396 + $0x41] sm:$0xff]
      %v451 = vld [vmem:[%s396 + $0x51] sm:$0xff]
      %v452 = vld [vmem:[%s396 + $0x61] sm:$0xff]
      %v453 = vld [vmem:[%s396 + $0x71] sm:$0xff]
      %462 = vrot.lane.b32.xlu0 %v446, 16
      %v463 = vpop.permute.xlu0 %462
      %464 = vrot.lane.b32.xlu0 %v447, 16
      %v465 = vpop.permute.xlu0 %464
      %466 = vrot.lane.b32.xlu0 %v448, 16
      %v467 = vpop.permute.xlu0 %466
      %468 = vrot.lane.b32.xlu0 %v449, 16
      %v469 = vpop.permute.xlu0 %468
      %470 = vrot.lane.b32.xlu0 %v450, 16
      %v471 = vpop.permute.xlu0 %470
      %472 = vrot.lane.b32.xlu0 %v451, 16
      %v473 = vpop.permute.xlu0 %472
      %474 = vrot.lane.b32.xlu0 %v452, 16
      %v475 = vpop.permute.xlu0 %474
      %476 = vrot.lane.b32.xlu0 %v453, 16
      %v477 = vpop.permute.xlu0 %476
      %vm486 = vcmask 162944
      %487 = vst.msk [vmem:[#allocation2] sm:$0xff] %vm486, %v463
      %488 = vst.msk [vmem:[#allocation2 + $0x8] sm:$0xff] %vm486, %v465
      %489 = vst.msk [vmem:[#allocation2 + $0x10] sm:$0xff] %vm486, %v467
      %490 = vst.msk [vmem:[#allocation2 + $0x18] sm:$0xff] %vm486, %v469
      %491 = vst.msk [vmem:[#allocation2 + $0x20] sm:$0xff] %vm486, %v471
      %492 = vst.msk [vmem:[#allocation2 + $0x28] sm:$0xff] %vm486, %v473
      %493 = vst.msk [vmem:[#allocation2 + $0x30] sm:$0xff] %vm486, %v475
      %494 = vst.msk [vmem:[#allocation2 + $0x38] sm:$0xff] %vm486, %v477
      %v495 = vld [vmem:[%s396 + $0x2] sm:$0xff]
      %v496 = vld [vmem:[%s396 + $0x12] sm:$0xff]
      %v497 = vld [vmem:[%s396 + $0x22] sm:$0xff]
      %v498 = vld [vmem:[%s396 + $0x32] sm:$0xff]
      %v499 = vld [vmem:[%s396 + $0x42] sm:$0xff]
      %v500 = vld [vmem:[%s396 + $0x52] sm:$0xff]
      %v501 = vld [vmem:[%s396 + $0x62] sm:$0xff]
      %v502 = vld [vmem:[%s396 + $0x72] sm:$0xff]
      %511 = vrot.lane.b32.xlu0 %v495, 20
      %v512 = vpop.permute.xlu0 %511
      %513 = vrot.lane.b32.xlu0 %v496, 20
      %v514 = vpop.permute.xlu0 %513
      %515 = vrot.lane.b32.xlu0 %v497, 20
      %v516 = vpop.permute.xlu0 %515
      %517 = vrot.lane.b32.xlu0 %v498, 20
      %v518 = vpop.permute.xlu0 %517
      %519 = vrot.lane.b32.xlu0 %v499, 20
      %v520 = vpop.permute.xlu0 %519
      %521 = vrot.lane.b32.xlu0 %v500, 20
      %v522 = vpop.permute.xlu0 %521
      %523 = vrot.lane.b32.xlu0 %v501, 20
      %v524 = vpop.permute.xlu0 %523
      %525 = vrot.lane.b32.xlu0 %v502, 20
      %v526 = vpop.permute.xlu0 %525
      %vm535 = vcmask 195744
      %536 = vst.msk [vmem:[#allocation2] sm:$0xff] %vm535, %v512
      %537 = vst.msk [vmem:[#allocation2 + $0x8] sm:$0xff] %vm535, %v514
      %538 = vst.msk [vmem:[#allocation2 + $0x10] sm:$0xff] %vm535, %v516
      %539 = vst.msk [vmem:[#allocation2 + $0x18] sm:$0xff] %vm535, %v518
      %540 = vst.msk [vmem:[#allocation2 + $0x20] sm:$0xff] %vm535, %v520
      %541 = vst.msk [vmem:[#allocation2 + $0x28] sm:$0xff] %vm535, %v522
      %542 = vst.msk [vmem:[#allocation2 + $0x30] sm:$0xff] %vm535, %v524
      %543 = vst.msk [vmem:[#allocation2 + $0x38] sm:$0xff] %vm535, %v526
      %s544 = scalar_lea.vmem %s256, 32
      %v545 = vld [vmem:[%s544] sm:$0xff]
      %v546 = vld [vmem:[%s544 + $0x10] sm:$0xff]
      %v547 = vld [vmem:[%s544 + $0x20] sm:$0xff]
      %v548 = vld [vmem:[%s544 + $0x30] sm:$0xff]
      %v549 = vld [vmem:[%s544 + $0x40] sm:$0xff]
      %v550 = vld [vmem:[%s544 + $0x50] sm:$0xff]
      %v551 = vld [vmem:[%s544 + $0x60] sm:$0xff]
      %v552 = vld [vmem:[%s544 + $0x70] sm:$0xff]
      %561 = vrot.lane.b32.xlu0 %v545, 24
      %v562 = vpop.permute.xlu0 %561
      %563 = vrot.lane.b32.xlu0 %v546, 24
      %v564 = vpop.permute.xlu0 %563
      %565 = vrot.lane.b32.xlu0 %v547, 24
      %v566 = vpop.permute.xlu0 %565
      %567 = vrot.lane.b32.xlu0 %v548, 24
      %v568 = vpop.permute.xlu0 %567
      %569 = vrot.lane.b32.xlu0 %v549, 24
      %v570 = vpop.permute.xlu0 %569
      %571 = vrot.lane.b32.xlu0 %v550, 24
      %v572 = vpop.permute.xlu0 %571
      %573 = vrot.lane.b32.xlu0 %v551, 24
      %v574 = vpop.permute.xlu0 %573
      %575 = vrot.lane.b32.xlu0 %v552, 24
      %v576 = vpop.permute.xlu0 %575
      %vm585 = vcmask 228544
      %586 = vst.msk [vmem:[#allocation2] sm:$0xff] %vm585, %v562
      %587 = vst.msk [vmem:[#allocation2 + $0x8] sm:$0xff] %vm585, %v564
      %588 = vst.msk [vmem:[#allocation2 + $0x10] sm:$0xff] %vm585, %v566
      %589 = vst.msk [vmem:[#allocation2 + $0x18] sm:$0xff] %vm585, %v568
      %590 = vst.msk [vmem:[#allocation2 + $0x20] sm:$0xff] %vm585, %v570
      %591 = vst.msk [vmem:[#allocation2 + $0x28] sm:$0xff] %vm585, %v572
      %592 = vst.msk [vmem:[#allocation2 + $0x30] sm:$0xff] %vm585, %v574
      %593 = vst.msk [vmem:[#allocation2 + $0x38] sm:$0xff] %vm585, %v576
      %v594 = vld [vmem:[%s544 + $0x1] sm:$0xff]
      %v595 = vld [vmem:[%s544 + $0x11] sm:$0xff]
      %v596 = vld [vmem:[%s544 + $0x21] sm:$0xff]
      %v597 = vld [vmem:[%s544 + $0x31] sm:$0xff]
      %v598 = vld [vmem:[%s544 + $0x41] sm:$0xff]
      %v599 = vld [vmem:[%s544 + $0x51] sm:$0xff]
      %v600 = vld [vmem:[%s544 + $0x61] sm:$0xff]
      %v601 = vld [vmem:[%s544 + $0x71] sm:$0xff]
      %610 = vrot.lane.b32.xlu0 %v594, 28
      %v611 = vpop.permute.xlu0 %610
      %612 = vrot.lane.b32.xlu0 %v595, 28
      %v613 = vpop.permute.xlu0 %612
      %614 = vrot.lane.b32.xlu0 %v596, 28
      %v615 = vpop.permute.xlu0 %614
      %616 = vrot.lane.b32.xlu0 %v597, 28
      %v617 = vpop.permute.xlu0 %616
      %618 = vrot.lane.b32.xlu0 %v598, 28
      %v619 = vpop.permute.xlu0 %618
      %620 = vrot.lane.b32.xlu0 %v599, 28
      %v621 = vpop.permute.xlu0 %620
      %622 = vrot.lane.b32.xlu0 %v600, 28
      %v623 = vpop.permute.xlu0 %622
      %624 = vrot.lane.b32.xlu0 %v601, 28
      %v625 = vpop.permute.xlu0 %624
      %vm634 = vcmask 261344
      %635 = vst.msk [vmem:[#allocation2] sm:$0xff] %vm634, %v611
      %636 = vst.msk [vmem:[#allocation2 + $0x8] sm:$0xff] %vm634, %v613
      %637 = vst.msk [vmem:[#allocation2 + $0x10] sm:$0xff] %vm634, %v615
      %638 = vst.msk [vmem:[#allocation2 + $0x18] sm:$0xff] %vm634, %v617
      %639 = vst.msk [vmem:[#allocation2 + $0x20] sm:$0xff] %vm634, %v619
      %640 = vst.msk [vmem:[#allocation2 + $0x28] sm:$0xff] %vm634, %v621
      %641 = vst.msk [vmem:[#allocation2 + $0x30] sm:$0xff] %vm634, %v623
      %642 = vst.msk [vmem:[#allocation2 + $0x38] sm:$0xff] %vm634, %v625
      %v643 = vld [vmem:[%s544 + $0x2] sm:$0xff]
      %v644 = vld [vmem:[%s544 + $0x12] sm:$0xff]
      %v645 = vld [vmem:[%s544 + $0x22] sm:$0xff]
      %v646 = vld [vmem:[%s544 + $0x32] sm:$0xff]
      %v647 = vld [vmem:[%s544 + $0x42] sm:$0xff]
      %v648 = vld [vmem:[%s544 + $0x52] sm:$0xff]
      %v649 = vld [vmem:[%s544 + $0x62] sm:$0xff]
      %v650 = vld [vmem:[%s544 + $0x72] sm:$0xff]
      %659 = vrot.lane.b32.xlu0 %v643, 32
      %v660 = vpop.permute.xlu0 %659
      %661 = vrot.lane.b32.xlu0 %v644, 32
      %v662 = vpop.permute.xlu0 %661
      %663 = vrot.lane.b32.xlu0 %v645, 32
      %v664 = vpop.permute.xlu0 %663
      %665 = vrot.lane.b32.xlu0 %v646, 32
      %v666 = vpop.permute.xlu0 %665
      %667 = vrot.lane.b32.xlu0 %v647, 32
      %v668 = vpop.permute.xlu0 %667
      %669 = vrot.lane.b32.xlu0 %v648, 32
      %v670 = vpop.permute.xlu0 %669
      %671 = vrot.lane.b32.xlu0 %v649, 32
      %v672 = vpop.permute.xlu0 %671
      %673 = vrot.lane.b32.xlu0 %v650, 32
      %v674 = vpop.permute.xlu0 %673
      %vm683 = vcmask 294144
      %684 = vst.msk [vmem:[#allocation2] sm:$0xff] %vm683, %v660
      %685 = vst.msk [vmem:[#allocation2 + $0x8] sm:$0xff] %vm683, %v662
      %686 = vst.msk [vmem:[#allocation2 + $0x10] sm:$0xff] %vm683, %v664
      %687 = vst.msk [vmem:[#allocation2 + $0x18] sm:$0xff] %vm683, %v666
      %688 = vst.msk [vmem:[#allocation2 + $0x20] sm:$0xff] %vm683, %v668
      %689 = vst.msk [vmem:[#allocation2 + $0x28] sm:$0xff] %vm683, %v670
      %690 = vst.msk [vmem:[#allocation2 + $0x30] sm:$0xff] %vm683, %v672
      %691 = vst.msk [vmem:[#allocation2 + $0x38] sm:$0xff] %vm683, %v674
      %v692 = vld [vmem:[#allocation2] sm:$0xff]
      %v693 = vld [vmem:[#allocation2 + $0x8] sm:$0xff]
      %v694 = vld [vmem:[#allocation2 + $0x10] sm:$0xff]
      %v695 = vld [vmem:[#allocation2 + $0x18] sm:$0xff]
      %v696 = vld [vmem:[#allocation2 + $0x20] sm:$0xff]
      %v697 = vld [vmem:[#allocation2 + $0x28] sm:$0xff]
      %v698 = vld [vmem:[#allocation2 + $0x30] sm:$0xff]
      %v699 = vld [vmem:[#allocation2 + $0x38] sm:$0xff]
      %v700 = vld [vmem:[%s265] sm:$0xff]
      %v701 = vld [vmem:[%s265 + $0x8] sm:$0xff]
      %v702 = vld [vmem:[%s265 + $0x10] sm:$0xff]
      %v703 = vld [vmem:[%s265 + $0x18] sm:$0xff]
      %v704 = vld [vmem:[%s265 + $0x20] sm:$0xf]
      %vm705 = vcmask 293888
      %v707 = vsel %vm705, %v692, 0
      %v710 = vsel %vm705, %v693, 0
      %v713 = vsel %vm705, %v694, 0
      %v716 = vsel %vm705, %v695, 0
      %v719 = vsel %vm705, %v696, 0
      %v722 = vsel %vm705, %v697, 0
      %v725 = vsel %vm705, %v698, 0
      %v728 = vsel %vm705, %v699, 0
      %vm730 = vcmask 1043456
      %v732 = vsel %vm730, %v704, 0
      %734 = vmatprep.subr.mxu0 0.0
      %735 = vmatpush1.msra.mxu0 %v700
      %736 = vmatprep.subr.mxu0 0.0
      %737 = vmatpush1.msra.mxu0 %v701
      %738 = vmatprep.subr.mxu0 0.0
      %739 = vmatpush1.msra.mxu0 %v702
      %740 = vmatprep.subr.mxu0 0.0
      %741 = vmatpush1.msra.mxu0 %v703
      %742 = vmatprep.subr.mxu0 0.0
      %743 = vmatpush1.msra.mxu0 %v732
      %744 = vmatprep.subr.mxu0 0.0
      %745 = vmatpush1.msra.mxu0 0.0
      %746 = vmatprep.subr.mxu0 0.0
      %747 = vmatpush1.msra.mxu0 0.0
      %748 = vmatprep.subr.mxu0 0.0
      %749 = vmatpush1.msra.mxu0 0.0
      %750 = vmatprep.subr.mxu0 0.0
      %751 = vmatpush1.msra.mxu0 0.0
      %752 = vmatprep.subr.mxu0 0.0
      %753 = vmatpush1.msra.mxu0 0.0
      %754 = vmatprep.subr.mxu0 0.0
      %755 = vmatpush1.msra.mxu0 0.0
      %756 = vmatprep.subr.mxu0 0.0
      %757 = vmatpush1.msra.mxu0 0.0
      %758 = vmatprep.subr.mxu0 0.0
      %759 = vmatpush1.msra.mxu0 0.0
      %760 = vmatprep.subr.mxu0 0.0
      %761 = vmatpush1.msra.mxu0 0.0
      %762 = vmatprep.subr.mxu0 0.0
      %763 = vmatpush1.msra.mxu0 0.0
      %764 = vmatprep.subr.mxu0 0.0
      %765 = vmatpush1.msra.mxu0 0.0
      %766 = vmatprep.subr.mxu0 0.0
      %767 = vmatpush1.msra.mxu0 0.0
      %768 = vmatprep.subr.mxu0 0.0
      %769 = vmatpush1.msra.mxu0 0.0
      %770 = vmatprep.subr.mxu0 0.0
      %771 = vmatpush1.msra.mxu0 0.0
      %772 = vmatprep.subr.mxu0 0.0
      %773 = vmatpush1.msra.mxu0 0.0
      %774 = vmatprep.subr.mxu0 0.0
      %775 = vmatpush1.msra.mxu0 0.0
      %776 = vmatprep.subr.mxu0 0.0
      %777 = vmatpush1.msra.mxu0 0.0
      %778 = vmatprep.subr.mxu0 0.0
      %779 = vmatpush1.msra.mxu0 0.0
      %780 = vmatprep.subr.mxu0 0.0
      %781 = vmatpush1.msra.mxu0 0.0
      %782 = vmatprep.subr.mxu0 0.0
      %783 = vmatpush1.msra.mxu0 0.0
      %784 = vmatprep.subr.mxu0 0.0
      %785 = vmatpush1.msra.mxu0 0.0
      %786 = vmatprep.subr.mxu0 0.0
      %787 = vmatpush1.msra.mxu0 0.0
      %788 = vmatprep.subr.mxu0 0.0
      %789 = vmatpush1.msra.mxu0 0.0
      %790 = vmatprep.subr.mxu0 0.0
      %791 = vmatpush1.msra.mxu0 0.0
      %792 = vmatprep.subr.mxu0 0.0
      %793 = vmatpush1.msra.mxu0 0.0
      %794 = vmatprep.subr.mxu0 0.0
      %795 = vmatpush1.msra.mxu0 0.0
      %796 = vmatprep.subr.mxu0 0.0
      %797 = vmatpush1.msra.mxu0 0.0
      %798 = vmatprep.mubr.f32.mxu0 0.0
      %799 = vmatmul.mubr.f32.gmra.mrb[0].mxu0 %v707
      %v800 = vpop.f32.mrb[0].mxu0
      %v801 = vadd.f32 0.0, %v800
      %v802 = vpop.f32.mrb[0].mxu0
      %803 = vmatprep.mubr.f32.mxu0 0.0
      %804 = vmatmul.mubr.f32.gmra.mrb[0].mxu0 %v710
      %v805 = vpop.f32.mrb[0].mxu0
      %v806 = vadd.f32 0.0, %v805
      %v807 = vpop.f32.mrb[0].mxu0
      %808 = vmatprep.mubr.f32.mxu0 0.0
      %809 = vmatmul.mubr.f32.gmra.mrb[0].mxu0 %v713
      %v810 = vpop.f32.mrb[0].mxu0
      %v811 = vadd.f32 0.0, %v810
      %v812 = vpop.f32.mrb[0].mxu0
      %813 = vmatprep.mubr.f32.mxu0 0.0
      %814 = vmatmul.mubr.f32.gmra.mrb[0].mxu0 %v716
      %v815 = vpop.f32.mrb[0].mxu0
      %v816 = vadd.f32 0.0, %v815
      %v817 = vpop.f32.mrb[0].mxu0
      %818 = vmatprep.mubr.f32.mxu0 0.0
      %819 = vmatmul.mubr.f32.gmra.mrb[0].mxu0 %v719
      %v820 = vpop.f32.mrb[0].mxu0
      %v821 = vadd.f32 0.0, %v820
      %v822 = vpop.f32.mrb[0].mxu0
      %823 = vmatprep.mubr.f32.mxu0 0.0
      %824 = vmatmul.mubr.f32.gmra.mrb[0].mxu0 %v722
      %v825 = vpop.f32.mrb[0].mxu0
      %v826 = vadd.f32 0.0, %v825
      %v827 = vpop.f32.mrb[0].mxu0
      %828 = vmatprep.mubr.f32.mxu0 0.0
      %829 = vmatmul.mubr.f32.gmra.mrb[0].mxu0 %v725
      %v830 = vpop.f32.mrb[0].mxu0
      %v831 = vadd.f32 0.0, %v830
      %v832 = vpop.f32.mrb[0].mxu0
      %833 = vmatprep.mubr.f32.mxu0 0.0
      %834 = vmatmul.mubr.f32.gmra.mrb[0].mxu0 %v728
      %v835 = vpop.f32.mrb[0].mxu0
      %v836 = vadd.f32 0.0, %v835
      %v837 = vpop.f32.mrb[0].mxu0
      %838 = vdwg.mxu0
      %p839 = scmp.eq.s32.totalorder %s23, 0
      // Predicated region
      $region33: #{conv3d_bn_forward.1} parent=31 // pred_check
        %p840 = pneg %p839
      $region34: #{conv3d_bn_forward.1} parent=31 // pred_check_branch
        %842 = sbr.rel (%p840) target = $region36
      $region35: #{conv3d_bn_forward.1} parent=31 // pred_region
        %843 = vst [vmem:[#allocation3] sm:$0xff] %v801
        %844 = vst [vmem:[#allocation3 + $0x8] sm:$0xff] %v806
        %845 = vst [vmem:[#allocation3 + $0x10] sm:$0xff] %v811
        %846 = vst [vmem:[#allocation3 + $0x18] sm:$0xff] %v816
        %847 = vst [vmem:[#allocation3 + $0x20] sm:$0xff] %v821
        %848 = vst [vmem:[#allocation3 + $0x28] sm:$0xff] %v826
        %849 = vst [vmem:[#allocation3 + $0x30] sm:$0xff] %v831
        %850 = vst [vmem:[#allocation3 + $0x38] sm:$0xff] %v836
      $region36: #{conv3d_bn_forward.1} parent=31 // pred_fallthru
        _
      %p851 = scmp.gt.s32.totalorder %s23, 0
      %p852 = scmp.lt.s32.totalorder %s23, 2
      %p853 = pnand %p851, %p852
      %p854 = pneg %p853
      // Predicated region
      $region37: #{conv3d_bn_forward.1} parent=31 // pred_check
        _
      $region38: #{conv3d_bn_forward.1} parent=31 // pred_check_branch
        %856 = sbr.rel (%p853) target = $region40
      $region39: #{conv3d_bn_forward.1} parent=31 // pred_region
        %v857 = vld [vmem:[#allocation3] sm:$0xff]
        %v858 = vld [vmem:[#allocation3 + $0x8] sm:$0xff]
        %v859 = vld [vmem:[#allocation3 + $0x10] sm:$0xff]
        %v860 = vld [vmem:[#allocation3 + $0x18] sm:$0xff]
        %v861 = vld [vmem:[#allocation3 + $0x20] sm:$0xff]
        %v862 = vld [vmem:[#allocation3 + $0x28] sm:$0xff]
        %v863 = vld [vmem:[#allocation3 + $0x30] sm:$0xff]
        %v864 = vld [vmem:[#allocation3 + $0x38] sm:$0xff]
        %v865 = vadd.f32 %v857, %v801
        %v866 = vadd.f32 %v858, %v806
        %v867 = vadd.f32 %v859, %v811
        %v868 = vadd.f32 %v860, %v816
        %v869 = vadd.f32 %v861, %v821
        %v870 = vadd.f32 %v862, %v826
        %v871 = vadd.f32 %v863, %v831
        %v872 = vadd.f32 %v864, %v836
        %873 = vst [vmem:[#allocation3] sm:$0xff] %v865
        %874 = vst [vmem:[#allocation3 + $0x8] sm:$0xff] %v866
        %875 = vst [vmem:[#allocation3 + $0x10] sm:$0xff] %v867
        %876 = vst [vmem:[#allocation3 + $0x18] sm:$0xff] %v868
        %877 = vst [vmem:[#allocation3 + $0x20] sm:$0xff] %v869
        %878 = vst [vmem:[#allocation3 + $0x28] sm:$0xff] %v870
        %879 = vst [vmem:[#allocation3 + $0x30] sm:$0xff] %v871
        %880 = vst [vmem:[#allocation3 + $0x38] sm:$0xff] %v872
      $region40: #{conv3d_bn_forward.1} parent=31 // pred_fallthru
        _
      %p881 = scmp.eq.s32.totalorder %s23, 2
      // Predicated region
      $region41: #{conv3d_bn_forward.1} parent=31 // pred_check
        %p882 = pneg %p881
      $region42: #{conv3d_bn_forward.1} parent=31 // pred_check_branch
        %884 = sbr.rel (%p882) target = $region44
      $region43: #{conv3d_bn_forward.1} parent=31 // pred_region
        %v885 = vld [vmem:[#allocation3] sm:$0xff]
        %v886 = vld [vmem:[#allocation3 + $0x8] sm:$0xff]
        %v887 = vld [vmem:[#allocation3 + $0x10] sm:$0xff]
        %v888 = vld [vmem:[#allocation3 + $0x18] sm:$0xff]
        %v889 = vld [vmem:[#allocation3 + $0x20] sm:$0xff]
        %v890 = vld [vmem:[#allocation3 + $0x28] sm:$0xff]
        %v891 = vld [vmem:[#allocation3 + $0x30] sm:$0xff]
        %v892 = vld [vmem:[#allocation3 + $0x38] sm:$0xff]
        %v893 = vadd.f32 %v885, %v801
        %v894 = vadd.f32 %v886, %v806
        %v895 = vadd.f32 %v887, %v811
        %v896 = vadd.f32 %v888, %v816
        %v897 = vadd.f32 %v889, %v821
        %v898 = vadd.f32 %v890, %v826
        %v899 = vadd.f32 %v891, %v831
        %v900 = vadd.f32 %v892, %v836
        %v901 = vld [vmem:[%s268] sm:$0x1]
        %v903 = vlaneseq
        %v904 = vshrl.u32 %v903, 7
        %v905 = vsub.s32 0, %v904
        %v906 = vrot.slane %v901, %v905
        %v908 = vadd.f32 %v893, %v906
        %v909 = vadd.f32 %v894, %v906
        %v910 = vadd.f32 %v895, %v906
        %v911 = vadd.f32 %v896, %v906
        %v912 = vadd.f32 %v897, %v906
        %v913 = vadd.f32 %v898, %v906
        %v914 = vadd.f32 %v899, %v906
        %v915 = vadd.f32 %v900, %v906
        %916 = vst [vmem:[%s280] sm:$0xff] %v908
        %917 = vst [vmem:[%s280 + $0x8] sm:$0xff] %v909
        %918 = vst [vmem:[%s280 + $0x10] sm:$0xff] %v910
        %919 = vst [vmem:[%s280 + $0x18] sm:$0xff] %v911
        %920 = vst [vmem:[%s280 + $0x20] sm:$0xff] %v912
        %921 = vst [vmem:[%s280 + $0x28] sm:$0xff] %v913
        %922 = vst [vmem:[%s280 + $0x30] sm:$0xff] %v914
        %923 = vst [vmem:[%s280 + $0x38] sm:$0xff] %v915
      $region44: #{conv3d_bn_forward.1} parent=31 // pred_fallthru
        _
      %p924 = scmp.lt.s32.totalorder %s20, 1
      %s925 = scalar_select %p924, %s20, 1
      %p926 = scmp.lt.s32.totalorder %s21, 3
      %s927 = scalar_select %p926, %s21, 3
      %p928 = scmp.lt.s32.totalorder %s22, 0
      %s929 = scalar_select %p928, %s22, 0
      %s930 = smul.addr %s927, 8
      %s931 = sadd.s32 %s929, %s930
      %s932 = smul.addr %s925, 32
      %s933 = sadd.s32 %s931, %s932
      %s934 = smul.addr %s933, 8
      %s935 = scalar_lea.vmem %s3, %s934
      // Predicated region
      $region45: #{conv3d_bn_forward.1} parent=31 // pred_check
        %p936 = pneg %p146
      $region46: #{conv3d_bn_forward.1} parent=31 // pred_check_branch
        %938 = sbr.rel (%p936) target = $region48
      $region47: #{conv3d_bn_forward.1} parent=31 // pred_region
        _
      $region48: #{conv3d_bn_forward.1} parent=31 // pred_fallthru
        _
    $region32: #{conv3d_bn_forward.1} parent=5 // pred_fallthru
      _
    %p939 = scmp.le.s32.totalorder 2, %s9
    // Predicated region
    $region49: #{conv3d_bn_forward.1} parent=5 // pred_check
      %p940 = pneg %p939
    $region50: #{conv3d_bn_forward.1} parent=5 // pred_check_branch
      %942 = sbr.rel (%p940) target = $region52
    $region51: #{conv3d_bn_forward.1} parent=5 // pred_region
      %s943 = ssub.s32 %s9, 2
      // Predicated region
      $region53: #{conv3d_bn_forward.1} parent=51 // pred_check
        %p944 = pneg %p152
      $region54: #{conv3d_bn_forward.1} parent=51 // pred_check_branch
        %946 = sbr.rel (%p944) target = $region56
      $region55: #{conv3d_bn_forward.1} parent=51 // pred_region
        %p947 = scmp.lt.s32.totalorder %s24, 1
        %s948 = scalar_select %p947, %s24, 1
        %p949 = scmp.lt.s32.totalorder %s25, 3
        %s950 = scalar_select %p949, %s25, 3
        %p951 = scmp.lt.s32.totalorder %s26, 0
        %s952 = scalar_select %p951, %s26, 0
        %s953 = smul.addr %s950, 8
        %s954 = sadd.s32 %s952, %s953
        %s955 = smul.addr %s948, 32
        %s956 = sadd.s32 %s954, %s955
        %s957 = smul.addr %s956, 8
        %s958 = scalar_lea.vmem %s3, %s957
      $region56: #{conv3d_bn_forward.1} parent=51 // pred_fallthru
        _
    $region52: #{conv3d_bn_forward.1} parent=5 // pred_fallthru
      _
  $region6: #{conv3d_bn_forward.1} parent=0 // loop_footer
    %s13 = sadd.s32 1, %s9
  $region7: #{conv3d_bn_forward.1} parent=0 // loop_footer_branch
    %8 = sbr.rel target = $region3
  $region8: #{conv3d_bn_forward.1} parent=0 // loop_exit
    _

</llo_original>
